<compile_context>
chip_gen: v6e
topology: v6e:2x2x1
jax: 0.10.0
libtpu: 0.0.40
codegen_flags: <defaults>
</compile_context>

<pallas_src>
import math

import jax
import jax.numpy as jnp
from jax.experimental import pallas as pl
from jax.experimental.pallas import tpu as pltpu


def _round_up(x, m):
    return (x + m - 1) // m * m


# ---------------------------------------------------------------------------
# Kernels
# ---------------------------------------------------------------------------
def _gcn_layer1_kernel(adjt_ref, xs_ref, din_ref, dout_ref, w1_ref, b1_ref,
                       h_ref, acc_ref):
    """Row tile i, reduction step k of:
         h = dout * ReLU( din * (A^T (dout*X)) W1 + b1 )      (dout-fold for layer 2)
    xs_ref already holds dout*X (pre-scaled once in the wrapper)."""
    k = pl.program_id(1)

    @pl.when(k == 0)
    def _():
        acc_ref[...] = jnp.zeros_like(acc_ref)

    a = adjt_ref[...].astype(jnp.bfloat16)          # int8 0/1 -> bf16 (exact)
    acc_ref[...] += jnp.dot(a, xs_ref[...], preferred_element_type=jnp.float32)

    @pl.when(k == pl.num_programs(1) - 1)
    def _():
        h = jnp.dot(acc_ref[...].astype(jnp.bfloat16), w1_ref[...],
                    preferred_element_type=jnp.float32)
        h = jnp.maximum(h * din_ref[...] + b1_ref[...], 0.0)
        # Dropout(p=0.2) is eval-mode identity.
        # TODO(synk): training-mode dropout (pltpu.prng_seed + prng_random_bits) not emitted.
        # Fold layer-2's source-side normalization into this epilogue so layer 2
        # consumes h_ref directly (also zeroes padded rows since dout pad == 0).
        h_ref[...] = (h * dout_ref[...]).astype(h_ref.dtype)


def _gcn_layer2_kernel(adjt_ref, h_ref, din_ref, w23_ref, b23_ref,
                       o_ref, acc_ref):
    """Row tile i, reduction step k of:
         out = din * (A^T h) (W2 Wfc^T) + (b2 Wfc^T + bfc)
    h_ref already carries the dout scaling from layer 1's epilogue."""
    k = pl.program_id(1)

    @pl.when(k == 0)
    def _():
        acc_ref[...] = jnp.zeros_like(acc_ref)

    a = adjt_ref[...].astype(jnp.bfloat16)
    acc_ref[...] += jnp.dot(a, h_ref[...], preferred_element_type=jnp.float32)

    @pl.when(k == pl.num_programs(1) - 1)
    def _():
        o = jnp.dot(acc_ref[...].astype(jnp.bfloat16), w23_ref[...],
                    preferred_element_type=jnp.float32)
        o_ref[...] = o * din_ref[...] + b23_ref[...]


# ---------------------------------------------------------------------------
# Wrapper helpers
# ---------------------------------------------------------------------------
def _pick_tiles_and_vmem():
    """Per-generation defaults: bigger tiles + higher VMEM cap on v5e/v6e (128 MiB
    physical VMEM); conservative on v7x (64 MiB physical) and unknown chips."""
    row_tile, k_tile, vmem = 256, 512, 48 * 1024 * 1024
    try:
        kind = jax.devices()[0].device_kind.lower()
        if ("v5" in kind) or ("v6" in kind):
            row_tile, k_tile, vmem = 512, 1024, 96 * 1024 * 1024
    except Exception:
        pass
    return row_tile, k_tile, vmem


def prepare_graph(adj, n_pad):
    """A^T as int8 (halves the dominant HBM stream; exact for 0/1 adjacency) plus
    the padded degree-scale vectors. For a static graph this O(N^2) prep should be
    computed once and cached by the caller instead of per forward pass."""
    adj = adj.astype(jnp.float32)
    N = adj.shape[0]
    # DGL GraphConv norm='both', degrees clamped to >= 1 (allow_zero_in_degree=True).
    out_deg = jnp.clip(jnp.sum(adj, axis=1), 1.0, None)   # out-degree of src nodes
    in_deg = jnp.clip(jnp.sum(adj, axis=0), 1.0, None)    # in-degree of dst nodes
    dout = (out_deg ** -0.5).reshape(N, 1)
    din = (in_deg ** -0.5).reshape(N, 1)
    pad_n = n_pad - N
    adj_t_i8 = jnp.pad(adj.T, ((0, pad_n), (0, pad_n))).astype(jnp.int8)  # rows = dst
    din_p = jnp.pad(din, ((0, pad_n), (0, 0)))
    dout_p = jnp.pad(dout, ((0, pad_n), (0, 0)))
    return adj_t_i8, din_p, dout_p


def gcn_forward(adj, feat, params, *, row_tile=None, k_tile=None,
                vmem_limit_bytes=None):
    """adj: dense adjacency [N, N] (adj[i, j] = 1 means edge i -> j).
       feat: node features [N, in_feats]."""
    w1, b1, w2, b2, wfc, bfc = params
    N = adj.shape[0]
    in_feats = feat.shape[1]
    h1 = w1.shape[1]
    num_class = wfc.shape[0]

    d_row, d_k, d_vmem = _pick_tiles_and_vmem()
    row_tile = row_tile or d_row
    k_tile = k_tile or d_k
    vmem_limit_bytes = vmem_limit_bytes or d_vmem

    LANE = 128
    # Tile sizes: tm, tk are multiples of 128 with tm | tk | n_pad, so every block
    # is lane/sublane aligned (unmasked vld/vst) for bf16 and int8 alike.
    n_pad0 = _round_up(N, LANE)
    tm = min(row_tile, n_pad0)
    tk = max(tm, (min(k_tile, _round_up(N, tm)) // tm) * tm)
    n_pad = _round_up(N, tk)
    grid_rows = n_pad // tm        # "parallel" -> balanced across v7x's 2 TCs when >= 2
    grid_k = n_pad // tk           # "arbitrary" reduction axis

    in_pad = _round_up(in_feats, LANE)
    h1_pad = _round_up(h1, LANE)
    c_pad = _round_up(num_class, LANE)

    # TODO(synk): for a static graph, hoist prepare_graph() out of gcn_forward and cache it.
    adj_t_i8, din_p, dout_p = prepare_graph(adj, n_pad)

    # Pre-scale X by D_out^{-1/2} once (O(N*F), trivial) so the kernel only aggregates.
    xs = feat.astype(jnp.float32) * dout_p[:N]
    xs = jnp.pad(xs, ((0, n_pad - N), (0, in_pad - in_feats))).astype(jnp.bfloat16)

    w1_p = jnp.pad(w1.astype(jnp.float32),
                   ((0, in_pad - in_feats), (0, h1_pad - h1))).astype(jnp.bfloat16)
    b1_p = jnp.pad(b1.reshape(1, -1).astype(jnp.float32), ((0, 0), (0, h1_pad - h1)))

    # Fold conv2's projection and fc (linear-linear, no nonlinearity) into one matmul.
    w23 = w2.astype(jnp.float32) @ wfc.T.astype(jnp.float32)                 # (h1, C)
    b23 = (b2.astype(jnp.float32) @ wfc.T.astype(jnp.float32)
           + bfc.astype(jnp.float32)).reshape(1, -1)                          # (1, C)
    w23_p = jnp.pad(w23, ((0, h1_pad - h1), (0, c_pad - num_class))).astype(jnp.bfloat16)
    b23_p = jnp.pad(b23, ((0, 0), (0, c_pad - num_class)))

    compiler_params = pltpu.CompilerParams(
        dimension_semantics=("parallel", "arbitrary"),
        vmem_limit_bytes=vmem_limit_bytes,
    )

    # ---- Layer 1: GraphConv + ReLU (+ dropout identity), dout folded in ----
    flops1 = 2 * n_pad * n_pad * in_pad + 2 * n_pad * in_pad * h1_pad
    bytes1 = (n_pad * n_pad * 1                       # A^T int8
              + grid_rows * n_pad * in_pad * 2        # xs re-streamed per row tile
              + in_pad * h1_pad * 2 + h1_pad * 4
              + 2 * n_pad * 4 + n_pad * h1_pad * 2)
    h_bf16 = pl.pallas_call(
        _gcn_layer1_kernel,
        out_shape=jax.ShapeDtypeStruct((n_pad, h1_pad), jnp.bfloat16),
        grid=(grid_rows, grid_k),
        in_specs=[
            pl.BlockSpec((tm, tk), lambda i, k: (i, k)),        # A^T tile (int8)
            pl.BlockSpec((tk, in_pad), lambda i, k: (k, 0)),    # dout*X column block
            pl.BlockSpec((tm, 1), lambda i, k: (i, 0)),         # D_in^{-1/2} row tile
            pl.BlockSpec((tm, 1), lambda i, k: (i, 0)),         # D_out^{-1/2} row tile
            pl.BlockSpec((in_pad, h1_pad), lambda i, k: (0, 0)),  # W1
            pl.BlockSpec((1, h1_pad), lambda i, k: (0, 0)),     # b1
        ],
        out_specs=pl.BlockSpec((tm, h1_pad), lambda i, k: (i, 0)),
        scratch_shapes=[pltpu.VMEM((tm, in_pad), jnp.float32)],
        compiler_params=compiler_params,
        cost_estimate=pl.CostEstimate(flops=flops1, transcendentals=0,
                                      bytes_accessed=bytes1),
    )(adj_t_i8, xs, din_p, dout_p, w1_p, b1_p)

    # ---- Layer 2: GraphConv fused with fc -> logits (f32, lane-padded) ----
    flops2 = 2 * n_pad * n_pad * h1_pad + 2 * n_pad * h1_pad * c_pad
    bytes2 = (n_pad * n_pad * 1
              + grid_rows * n_pad * h1_pad * 2
              + h1_pad * c_pad * 2 + c_pad * 4
              + n_pad * 4 + n_pad * c_pad * 4)
    out_pad = pl.pallas_call(
        _gcn_layer2_kernel,
        out_shape=jax.ShapeDtypeStruct((n_pad, c_pad), jnp.float32),
        grid=(grid_rows, grid_k),
        in_specs=[
            pl.BlockSpec((tm, tk), lambda i, k: (i, k)),        # A^T tile (int8)
            pl.BlockSpec((tk, h1_pad), lambda i, k: (k, 0)),    # h (already dout-scaled)
            pl.BlockSpec((tm, 1), lambda i, k: (i, 0)),         # D_in^{-1/2} row tile
            pl.BlockSpec((h1_pad, c_pad), lambda i, k: (0, 0)),  # W2 @ Wfc^T
            pl.BlockSpec((1, c_pad), lambda i, k: (0, 0)),      # b2 @ Wfc^T + bfc
        ],
        out_specs=pl.BlockSpec((tm, c_pad), lambda i, k: (i, 0)),
        scratch_shapes=[pltpu.VMEM((tm, h1_pad), jnp.float32)],
        compiler_params=compiler_params,
        cost_estimate=pl.CostEstimate(flops=flops2, transcendentals=0,
                                      bytes_accessed=bytes2),
    )(adj_t_i8, h_bf16, din_p, w23_p, b23_p)

    return out_pad[:N, :num_class]


def init_params(key, in_feats, h_feats, num_class):
    k1, k2, k3 = jax.random.split(key, 3)
    # Deterministic synthetic params (shapes match GraphConv / Linear of the module).
    w1 = jax.random.normal(k1, (in_feats, h_feats[0]), jnp.float32) * 0.1
    b1 = jnp.zeros((h_feats[0],), jnp.float32)
    w2 = jax.random.normal(k2, (h_feats[0], h_feats[1]), jnp.float32) * 0.1
    b2 = jnp.zeros((h_feats[1],), jnp.float32)
    wfc = jax.random.normal(k3, (num_class, h_feats[1]), jnp.float32) * 0.1  # Linear: [out, in]
    bfc = jnp.zeros((num_class,), jnp.float32)
    return (w1, b1, w2, b2, wfc, bfc)


if __name__ == "__main__":
    key = jax.random.PRNGKey(0)
    k_adj, k_feat, k_param = jax.random.split(key, 3)

    N = 16            # number of graph nodes
    in_feats = 8
    h_feats = [32, 16]
    num_class = 4

    # Random sparse-ish directed graph as a dense 0/1 adjacency matrix.
    adj = (jax.random.uniform(k_adj, (N, N)) < 0.25).astype(jnp.float32)
    feat = jax.random.normal(k_feat, (N, in_feats), jnp.float32)

    params = init_params(k_param, in_feats, h_feats, num_class)

    out = gcn_forward(adj, feat, params)
    out = jax.block_until_ready(out)
    assert out.shape == (N, num_class)

    # Pure-JAX f32 reference (eval-mode dropout) — bf16 MXU inputs => loose tolerance.
    w1, b1, w2, b2, wfc, bfc = params
    out_deg = jnp.clip(adj.sum(1), 1.0, None)
    in_deg = jnp.clip(adj.sum(0), 1.0, None)
    ahat = (in_deg ** -0.5)[:, None] * adj.T * (out_deg ** -0.5)[None, :]
    h_ref = jnp.maximum(ahat @ (feat @ w1) + b1, 0.0)
    ref = (ahat @ (h_ref @ w2) + b2) @ wfc.T + bfc
    assert jnp.allclose(out, ref, atol=5e-2, rtol=5e-2)

    print("KERNEL_OK")
</pallas_src>

<mosaic_0001>
module attributes {stable_mosaic.version = 11 : i64} {
  func.func @_gcn_layer1_kernel(%arg0: i32, %arg1: i32, %arg2: memref<128x128xi8, #tpu.memory_space<vmem>>, %arg3: memref<128x128xbf16, #tpu.memory_space<vmem>>, %arg4: memref<128x1xf32, #tpu.memory_space<vmem>>, %arg5: memref<128x1xf32, #tpu.memory_space<vmem>>, %arg6: memref<128x128xbf16, #tpu.memory_space<vmem>>, %arg7: memref<1x128xf32, #tpu.memory_space<vmem>>, %arg8: memref<128x128xbf16, #tpu.memory_space<vmem>>, %arg9: memref<128x128xf32, #tpu.memory_space<vmem>>) attributes {dimension_semantics = [#tpu.dimension_semantics<parallel>, #tpu.dimension_semantics<arbitrary>], iteration_bounds = array<i64: 1, 1>, scalar_prefetch = 0 : i64, scratch_operands = 1 : i64, tpu.core_type = #tpu.core_type<tc>, window_params = [{transform_indices = @transform_0, window_bounds = array<i64: 128, 128>}, {transform_indices = @transform_1, window_bounds = array<i64: 128, 128>}, {transform_indices = @transform_2, window_bounds = array<i64: 128, 1>}, {transform_indices = @transform_3, window_bounds = array<i64: 128, 1>}, {pipeline_mode = #tpu.pipeline_mode<synchronous>, transform_indices = @transform_4, window_bounds = array<i64: 128, 128>}, {pipeline_mode = #tpu.pipeline_mode<synchronous>, transform_indices = @transform_5, window_bounds = array<i64: 1, 128>}, {transform_indices = @transform_6, window_bounds = array<i64: 128, 128>}]} {
    %c0_i32 = arith.constant 0 : i32
    %0 = arith.cmpi eq, %arg1, %c0_i32 : i32
    %1 = arith.extui %0 : i1 to i32
    %c0_i32_0 = arith.constant 0 : i32
    %2 = arith.cmpi ne, %1, %c0_i32_0 : i32
    scf.if %2 {
      %cst_10 = arith.constant 0.000000e+00 : f32
      %13 = vector.broadcast %cst_10 : f32 to vector<128x128xf32>
      %c0_11 = arith.constant 0 : index
      %c0_12 = arith.constant 0 : index
      %14 = vector.load %arg9[%c0_11, %c0_12] : memref<128x128xf32, #tpu.memory_space<vmem>>, vector<128x128xf32>
      tpu.vector_store %arg9[%c0_11, %c0_12], %13 {strides = array<i32>} : memref<128x128xf32, #tpu.memory_space<vmem>>, vector<128x128xf32>,
    } else {
    }
    %c0 = arith.constant 0 : index
    %c0_1 = arith.constant 0 : index
    %3 = vector.load %arg2[%c0, %c0_1] : memref<128x128xi8, #tpu.memory_space<vmem>>, vector<128x128xi8>
    %4 = arith.sitofp %3 : vector<128x128xi8> to vector<128x128xbf16>
    %c0_2 = arith.constant 0 : index
    %c0_3 = arith.constant 0 : index
    %5 = vector.load %arg9[%c0_2, %c0_3] : memref<128x128xf32, #tpu.memory_space<vmem>>, vector<128x128xf32>
    %c0_4 = arith.constant 0 : index
    %c0_5 = arith.constant 0 : index
    %6 = vector.load %arg3[%c0_4, %c0_5] : memref<128x128xbf16, #tpu.memory_space<vmem>>, vector<128x128xbf16>
    %cst = arith.constant dense<0.000000e+00> : vector<128x128xf32>
    %7 = tpu.matmul %4, %6, %cst {dimension_numbers = #tpu.dot_dimension_numbers<[1], [0], [0], [1], [0, 0, 1, 1], [], []>} : vector<128x128xbf16>, vector<128x128xbf16>, vector<128x128xf32> -> vector<128x128xf32>
    %8 = arith.addf %5, %7 : vector<128x128xf32>
    %c0_6 = arith.constant 0 : index
    %c0_7 = arith.constant 0 : index
    %9 = vector.load %arg9[%c0_6, %c0_7] : memref<128x128xf32, #tpu.memory_space<vmem>>, vector<128x128xf32>
    tpu.vector_store %arg9[%c0_6, %c0_7], %8 {strides = array<i32>} : memref<128x128xf32, #tpu.memory_space<vmem>>, vector<128x128xf32>,
    %c0_i32_8 = arith.constant 0 : i32
    %10 = arith.cmpi eq, %arg1, %c0_i32_8 : i32
    %11 = arith.extui %10 : i1 to i32
    %c0_i32_9 = arith.constant 0 : i32
    %12 = arith.cmpi ne, %11, %c0_i32_9 : i32
    scf.if %12 {
      %c0_10 = arith.constant 0 : index
      %c0_11 = arith.constant 0 : index
      %13 = vector.load %arg9[%c0_10, %c0_11] : memref<128x128xf32, #tpu.memory_space<vmem>>, vector<128x128xf32>
      %14 = arith.truncf %13 : vector<128x128xf32> to vector<128x128xbf16>
      %c0_12 = arith.constant 0 : index
      %c0_13 = arith.constant 0 : index
      %15 = vector.load %arg6[%c0_12, %c0_13] : memref<128x128xbf16, #tpu.memory_space<vmem>>, vector<128x128xbf16>
      %cst_14 = arith.constant dense<0.000000e+00> : vector<128x128xf32>
      %16 = tpu.matmul %14, %15, %cst_14 {dimension_numbers = #tpu.dot_dimension_numbers<[1], [0], [0], [1], [0, 0, 1, 1], [], []>} : vector<128x128xbf16>, vector<128x128xbf16>, vector<128x128xf32> -> vector<128x128xf32>
      %c0_15 = arith.constant 0 : index
      %c0_16 = arith.constant 0 : index
      %17 = vector.load %arg4[%c0_15, %c0_16] : memref<128x1xf32, #tpu.memory_space<vmem>>, vector<128x1xf32>
      %18 = vector.broadcast %17 : vector<128x1xf32> to vector<128x128xf32>
      %19 = arith.mulf %16, %18 : vector<128x128xf32>
      %c0_17 = arith.constant 0 : index
      %c0_18 = arith.constant 0 : index
      %20 = vector.load %arg7[%c0_17, %c0_18] : memref<1x128xf32, #tpu.memory_space<vmem>>, vector<1x128xf32>
      %21 = vector.broadcast %20 : vector<1x128xf32> to vector<128x128xf32>
      %22 = arith.addf %19, %21 : vector<128x128xf32>
      %cst_19 = arith.constant 0.000000e+00 : f32
      %23 = vector.broadcast %cst_19 : f32 to vector<128x128xf32>
      %24 = arith.maximumf %22, %23 : vector<128x128xf32>
      %c0_20 = arith.constant 0 : index
      %c0_21 = arith.constant 0 : index
      %25 = vector.load %arg5[%c0_20, %c0_21] : memref<128x1xf32, #tpu.memory_space<vmem>>, vector<128x1xf32>
      %26 = vector.broadcast %25 : vector<128x1xf32> to vector<128x128xf32>
      %27 = arith.mulf %24, %26 : vector<128x128xf32>
      %28 = arith.truncf %27 : vector<128x128xf32> to vector<128x128xbf16>
      %c0_22 = arith.constant 0 : index
      %c0_23 = arith.constant 0 : index
      %29 = vector.load %arg8[%c0_22, %c0_23] : memref<128x128xbf16, #tpu.memory_space<vmem>>, vector<128x128xbf16>
      tpu.vector_store %arg8[%c0_22, %c0_23], %28 {strides = array<i32>} : memref<128x128xbf16, #tpu.memory_space<vmem>>, vector<128x128xbf16>,
    } else {
    }
    return
  }
  func.func @transform_0(%arg0: i32, %arg1: i32) -> (i32, i32) {
    %c0_i32 = arith.constant 0 : i32
    return %arg0, %arg1 : i32, i32
  }
  func.func @transform_1(%arg0: i32, %arg1: i32) -> (i32, i32) {
    %c0_i32 = arith.constant 0 : i32
    %c0_i32_0 = arith.constant 0 : i32
    return %arg1, %c0_i32 : i32, i32
  }
  func.func @transform_2(%arg0: i32, %arg1: i32) -> (i32, i32) {
    %c0_i32 = arith.constant 0 : i32
    %c0_i32_0 = arith.constant 0 : i32
    return %arg0, %c0_i32 : i32, i32
  }
  func.func @transform_3(%arg0: i32, %arg1: i32) -> (i32, i32) {
    %c0_i32 = arith.constant 0 : i32
    %c0_i32_0 = arith.constant 0 : i32
    return %arg0, %c0_i32 : i32, i32
  }
  func.func @transform_4(%arg0: i32, %arg1: i32) -> (i32, i32) {
    %c0_i32 = arith.constant 0 : i32
    %c0_i32_0 = arith.constant 0 : i32
    %c0_i32_1 = arith.constant 0 : i32
    return %c0_i32, %c0_i32_0 : i32, i32
  }
  func.func @transform_5(%arg0: i32, %arg1: i32) -> (i32, i32) {
    %c0_i32 = arith.constant 0 : i32
    %c0_i32_0 = arith.constant 0 : i32
    %c0_i32_1 = arith.constant 0 : i32
    return %c0_i32, %c0_i32_0 : i32, i32
  }
  func.func @transform_6(%arg0: i32, %arg1: i32) -> (i32, i32) {
    %c0_i32 = arith.constant 0 : i32
    %c0_i32_0 = arith.constant 0 : i32
    return %arg0, %c0_i32 : i32, i32
  }
}

</mosaic_0001>

<llo_original>
// kernel: tpu_custom_call.1
$region0: #{tpu_custom_call.1}
  #allocation0 [shape = 'u32[]', space=smem, size = 0x4, offset = 0x4, fixed_abs, tag = 'smem constant byte address 0x4 - core index']
  #allocation1 [shape = 'u32[144,128]{1,0:T(1,128)}', space=vmem, size = 0x12000, scoped, tag = 'internal scratch']
  #allocation2 [shape = 'f32[128,128]{1,0:T(8,128)}', space=vmem, size = 0x10000, scoped, tag = 'scratch operand']
  %s0 = inlined_call_operand.vmem [shape: s8[128,128], index: 0, kind: input, shape index: {}]
  %s1 = inlined_call_operand.vmem [shape: bf16[128,128], index: 1, kind: input, shape index: {}]
  %s2 = inlined_call_operand.vmem [shape: f32[128,1], index: 2, kind: input, shape index: {}]
  %s3 = inlined_call_operand.vmem [shape: f32[128,1], index: 3, kind: input, shape index: {}]
  %s4 = inlined_call_operand.vmem [shape: bf16[128,128], index: 4, kind: input, shape index: {}]
  %s5 = inlined_call_operand.vmem [shape: f32[1,128], index: 5, kind: input, shape index: {}]
  %s6 = inlined_call_operand.hbm [shape: bf16[128,128], index: 6, kind: output, shape index: {}]
  %s7 = sld [smem:[#allocation0]]
  $region42: #{tpu_custom_call.1} parent=0
    _
  %s9 = ssub.s32 1, %s7
  %s10 = scalar_select 0, %s9, %s7
  $region1: #{tpu_custom_call.1} parent=0
    #allocation3 [shape = 'u8[32768]{0}', space=vmem, size = 0x8000, scoped, tag = 'output window, operand 0, single buffered']
    #allocation4 [shape = 's32[1]{0}', space=sflag, size = 0x4, scoped, tag = 'scoped memory for tpu_custom_call.1']
    %11 = vsyncpa [#allocation4], 0
    // Predicated region
    $region2: #{tpu_custom_call.1} parent=1 // pred_check
      _
    $region3: #{tpu_custom_call.1} parent=1 // pred_check_branch
      %13 = sbr.rel (0) target = $region5
    $region4: #{tpu_custom_call.1} parent=1 // pred_region
      _
    $region5: #{tpu_custom_call.1} parent=1 // pred_fallthru
      _
    // Predicated region
    $region6: #{tpu_custom_call.1} parent=1 // pred_check
      _
    $region7: #{tpu_custom_call.1} parent=1 // pred_check_branch
      %15 = sbr.rel (0) target = $region9
    $region8: #{tpu_custom_call.1} parent=1 // pred_region
      _
    $region9: #{tpu_custom_call.1} parent=1 // pred_fallthru
      _
    // Predicated region
    $region10: #{tpu_custom_call.1} parent=1 // pred_check
      _
    $region11: #{tpu_custom_call.1} parent=1 // pred_check_branch
      %17 = sbr.rel (0) target = $region13
    $region12: #{tpu_custom_call.1} parent=1 // pred_region
      _
    $region13: #{tpu_custom_call.1} parent=1 // pred_fallthru
      _
    // Predicated region
    $region14: #{tpu_custom_call.1} parent=1 // pred_check
      _
    $region15: #{tpu_custom_call.1} parent=1 // pred_check_branch
      %19 = sbr.rel (0) target = $region17
    $region16: #{tpu_custom_call.1} parent=1 // pred_region
      _
    $region17: #{tpu_custom_call.1} parent=1 // pred_fallthru
      _
    // Predicated region
    $region18: #{tpu_custom_call.1} parent=1 // pred_check
      _
    $region19: #{tpu_custom_call.1} parent=1 // pred_check_branch
      %21 = sbr.rel (0) target = $region21
    $region20: #{tpu_custom_call.1} parent=1 // pred_region
      _
    $region21: #{tpu_custom_call.1} parent=1 // pred_fallthru
      _
    // Predicated region
    $region22: #{tpu_custom_call.1} parent=1 // pred_check
      _
    $region23: #{tpu_custom_call.1} parent=1 // pred_check_branch
      %23 = sbr.rel (0) target = $region25
    $region24: #{tpu_custom_call.1} parent=1 // pred_region
      _
    $region25: #{tpu_custom_call.1} parent=1 // pred_fallthru
      _
    %p25 = scmp.eq.s32.totalorder 0, 0
    // Predicated region
    $region26: #{tpu_custom_call.1} parent=1 // pred_check
      %p26 = pneg %p25
    $region27: #{tpu_custom_call.1} parent=1 // pred_check_branch
      %28 = sbr.rel (%p26) target = $region29
    $region28: #{tpu_custom_call.1} parent=1 // pred_region
      %29 = vst [vmem:[#allocation2] sm:$0xff] 0.0
      %30 = vst [vmem:[#allocation2 + $0x8] sm:$0xff] 0.0
      %31 = vst [vmem:[#allocation2 + $0x10] sm:$0xff] 0.0
      %32 = vst [vmem:[#allocation2 + $0x18] sm:$0xff] 0.0
      %33 = vst [vmem:[#allocation2 + $0x20] sm:$0xff] 0.0
      %34 = vst [vmem:[#allocation2 + $0x28] sm:$0xff] 0.0
      %35 = vst [vmem:[#allocation2 + $0x30] sm:$0xff] 0.0
      %36 = vst [vmem:[#allocation2 + $0x38] sm:$0xff] 0.0
      %37 = vst [vmem:[#allocation2 + $0x40] sm:$0xff] 0.0
      %38 = vst [vmem:[#allocation2 + $0x48] sm:$0xff] 0.0
      %39 = vst [vmem:[#allocation2 + $0x50] sm:$0xff] 0.0
      %40 = vst [vmem:[#allocation2 + $0x58] sm:$0xff] 0.0
      %41 = vst [vmem:[#allocation2 + $0x60] sm:$0xff] 0.0
      %42 = vst [vmem:[#allocation2 + $0x68] sm:$0xff] 0.0
      %43 = vst [vmem:[#allocation2 + $0x70] sm:$0xff] 0.0
      %44 = vst [vmem:[#allocation2 + $0x78] sm:$0xff] 0.0
    $region29: #{tpu_custom_call.1} parent=1 // pred_fallthru
      _
    %v45 = vld [vmem:[%s0] sm:$0xff]
    %v46 = vld [vmem:[%s0 + $0x8] sm:$0xff]
    %v47 = vld [vmem:[%s0 + $0x10] sm:$0xff]
    %v48 = vld [vmem:[%s0 + $0x18] sm:$0xff]
    %v49 = vunpack.c.l.s8.bf16 %v45
    %v50 = vunpack.c.h.s8.bf16 %v45
    %v51 = vunpack.c.l.s8.bf16 %v46
    %v52 = vunpack.c.h.s8.bf16 %v46
    %v53 = vunpack.c.l.s8.bf16 %v47
    %v54 = vunpack.c.h.s8.bf16 %v47
    %v55 = vunpack.c.l.s8.bf16 %v48
    %v56 = vunpack.c.h.s8.bf16 %v48
    %v57 = vld [vmem:[#allocation2] sm:$0xff]
    %v58 = vld [vmem:[#allocation2 + $0x8] sm:$0xff]
    %v59 = vld [vmem:[#allocation2 + $0x10] sm:$0xff]
    %v60 = vld [vmem:[#allocation2 + $0x18] sm:$0xff]
    %v61 = vld [vmem:[#allocation2 + $0x20] sm:$0xff]
    %v62 = vld [vmem:[#allocation2 + $0x28] sm:$0xff]
    %v63 = vld [vmem:[#allocation2 + $0x30] sm:$0xff]
    %v64 = vld [vmem:[#allocation2 + $0x38] sm:$0xff]
    %v65 = vld [vmem:[#allocation2 + $0x40] sm:$0xff]
    %v66 = vld [vmem:[#allocation2 + $0x48] sm:$0xff]
    %v67 = vld [vmem:[#allocation2 + $0x50] sm:$0xff]
    %v68 = vld [vmem:[#allocation2 + $0x58] sm:$0xff]
    %v69 = vld [vmem:[#allocation2 + $0x60] sm:$0xff]
    %v70 = vld [vmem:[#allocation2 + $0x68] sm:$0xff]
    %v71 = vld [vmem:[#allocation2 + $0x70] sm:$0xff]
    %v72 = vld [vmem:[#allocation2 + $0x78] sm:$0xff]
    %v73 = vld [vmem:[%s1] sm:$0xf]
    %v74 = vld [vmem:[%s1 + $0x4] sm:$0xf]
    %v75 = vld [vmem:[%s1 + $0x8] sm:$0xf]
    %v76 = vld [vmem:[%s1 + $0xc] sm:$0xf]
    %v77 = vld [vmem:[%s1 + $0x10] sm:$0xf]
    %v78 = vld [vmem:[%s1 + $0x14] sm:$0xf]
    %v79 = vld [vmem:[%s1 + $0x18] sm:$0xf]
    %v80 = vld [vmem:[%s1 + $0x1c] sm:$0xf]
    %v81 = vld [vmem:[%s1 + $0x20] sm:$0xf]
    %v82 = vld [vmem:[%s1 + $0x24] sm:$0xf]
    %v83 = vld [vmem:[%s1 + $0x28] sm:$0xf]
    %v84 = vld [vmem:[%s1 + $0x2c] sm:$0xf]
    %v85 = vld [vmem:[%s1 + $0x30] sm:$0xf]
    %v86 = vld [vmem:[%s1 + $0x34] sm:$0xf]
    %v87 = vld [vmem:[%s1 + $0x38] sm:$0xf]
    %v88 = vld [vmem:[%s1 + $0x3c] sm:$0xf]
    %v105 = vunpack.c.l.b16 %v73
    %v106 = vunpack.c.l.b16 %v74
    %v107 = vunpack.c.l.b16 %v75
    %v108 = vunpack.c.l.b16 %v76
    %v109 = vunpack.c.l.b16 %v77
    %v110 = vunpack.c.l.b16 %v78
    %v111 = vunpack.c.l.b16 %v79
    %v112 = vunpack.c.l.b16 %v80
    %v113 = vunpack.c.l.b16 %v81
    %v114 = vunpack.c.l.b16 %v82
    %v115 = vunpack.c.l.b16 %v83
    %v116 = vunpack.c.l.b16 %v84
    %v117 = vunpack.c.l.b16 %v85
    %v118 = vunpack.c.l.b16 %v86
    %v119 = vunpack.c.l.b16 %v87
    %v120 = vunpack.c.l.b16 %v88
    %v121 = vpack.c.b16 %v106, %v105
    %v122 = vpack.c.b16 %v108, %v107
    %v123 = vpack.c.b16 %v110, %v109
    %v124 = vpack.c.b16 %v112, %v111
    %v125 = vpack.c.b16 %v114, %v113
    %v126 = vpack.c.b16 %v116, %v115
    %v127 = vpack.c.b16 %v118, %v117
    %v128 = vpack.c.b16 %v120, %v119
    %137 = vmatprep.subr.bf16.mxu0 0
    %138 = vmatpush1.bf16.msra.mxu0 %v128
    %139 = vmatprep.subr.bf16.mxu0 0
    %140 = vmatpush1.bf16.msra.mxu0 %v127
    %141 = vmatprep.subr.bf16.mxu0 0
    %142 = vmatpush1.bf16.msra.mxu0 %v126
    %143 = vmatprep.subr.bf16.mxu0 0
    %144 = vmatpush1.bf16.msra.mxu0 %v125
    %145 = vmatprep.subr.bf16.mxu0 0
    %146 = vmatpush1.bf16.msra.mxu0 %v124
    %147 = vmatprep.subr.bf16.mxu0 0
    %148 = vmatpush1.bf16.msra.mxu0 %v123
    %149 = vmatprep.subr.bf16.mxu0 0
    %150 = vmatpush1.bf16.msra.mxu0 %v122
    %151 = vmatprep.subr.bf16.mxu0 0
    %152 = vmatpush1.bf16.msra.mxu0 %v121
    %153 = vmatprep.subr.bf16.mxu0 0
    %154 = vmatpush2.bf16.msra.mxu0 0
    %155 = vmatprep.subr.bf16.mxu0 0
    %156 = vmatpush2.bf16.msra.mxu0 0
    %157 = vmatprep.subr.bf16.mxu0 0
    %158 = vmatpush2.bf16.msra.mxu0 0
    %159 = vmatprep.subr.bf16.mxu0 0
    %160 = vmatpush2.bf16.msra.mxu0 0
    %161 = vmatprep.subr.bf16.mxu0 0
    %162 = vmatpush2.bf16.msra.mxu0 0
    %163 = vmatprep.subr.bf16.mxu0 0
    %164 = vmatpush2.bf16.msra.mxu0 0
    %165 = vmatprep.subr.bf16.mxu0 0
    %166 = vmatpush2.bf16.msra.mxu0 0
    %167 = vmatprep.subr.bf16.mxu0 0
    %168 = vmatpush2.bf16.msra.mxu0 0
    %169 = vmatprep.mubr.bf16.mxu0 0
    %170 = vmatmul.mubr.bf16.gmra.mxu0 %v49
    %v171 = vpop.f32.mrf.mxu0
    %v172 = vadd.f32 0.0, %v171
    %v173 = vpop.f32.mrf.mxu0
    %v174 = vpop.f32.mrf.mxu0
    %v175 = vadd.f32 0.0, %v174
    %v176 = vpop.f32.mrf.mxu0
    %177 = vmatprep.mubr.bf16.mxu0 0
    %178 = vmatmul.mubr.bf16.gmra.mxu0 %v50
    %v179 = vpop.f32.mrf.mxu0
    %v180 = vadd.f32 0.0, %v179
    %v181 = vpop.f32.mrf.mxu0
    %v182 = vpop.f32.mrf.mxu0
    %v183 = vadd.f32 0.0, %v182
    %v184 = vpop.f32.mrf.mxu0
    %185 = vmatprep.mubr.bf16.mxu0 0
    %186 = vmatmul.mubr.bf16.gmra.mxu0 %v51
    %v187 = vpop.f32.mrf.mxu0
    %v188 = vadd.f32 0.0, %v187
    %v189 = vpop.f32.mrf.mxu0
    %v190 = vpop.f32.mrf.mxu0
    %v191 = vadd.f32 0.0, %v190
    %v192 = vpop.f32.mrf.mxu0
    %193 = vmatprep.mubr.bf16.mxu0 0
    %194 = vmatmul.mubr.bf16.gmra.mxu0 %v52
    %v195 = vpop.f32.mrf.mxu0
    %v196 = vadd.f32 0.0, %v195
    %v197 = vpop.f32.mrf.mxu0
    %v198 = vpop.f32.mrf.mxu0
    %v199 = vadd.f32 0.0, %v198
    %v200 = vpop.f32.mrf.mxu0
    %201 = vmatprep.mubr.bf16.mxu0 0
    %202 = vmatmul.mubr.bf16.gmra.mxu0 %v53
    %v203 = vpop.f32.mrf.mxu0
    %v204 = vadd.f32 0.0, %v203
    %v205 = vpop.f32.mrf.mxu0
    %v206 = vpop.f32.mrf.mxu0
    %v207 = vadd.f32 0.0, %v206
    %v208 = vpop.f32.mrf.mxu0
    %209 = vmatprep.mubr.bf16.mxu0 0
    %210 = vmatmul.mubr.bf16.gmra.mxu0 %v54
    %v211 = vpop.f32.mrf.mxu0
    %v212 = vadd.f32 0.0, %v211
    %v213 = vpop.f32.mrf.mxu0
    %v214 = vpop.f32.mrf.mxu0
    %v215 = vadd.f32 0.0, %v214
    %v216 = vpop.f32.mrf.mxu0
    %217 = vmatprep.mubr.bf16.mxu0 0
    %218 = vmatmul.mubr.bf16.gmra.mxu0 %v55
    %v219 = vpop.f32.mrf.mxu0
    %v220 = vadd.f32 0.0, %v219
    %v221 = vpop.f32.mrf.mxu0
    %v222 = vpop.f32.mrf.mxu0
    %v223 = vadd.f32 0.0, %v222
    %v224 = vpop.f32.mrf.mxu0
    %225 = vmatprep.mubr.bf16.mxu0 0
    %226 = vmatmul.mubr.bf16.gmra.mxu0 %v56
    %v227 = vpop.f32.mrf.mxu0
    %v228 = vadd.f32 0.0, %v227
    %v229 = vpop.f32.mrf.mxu0
    %v230 = vpop.f32.mrf.mxu0
    %v231 = vadd.f32 0.0, %v230
    %v232 = vpop.f32.mrf.mxu0
    %233 = vdwg.mxu0
    %v234 = vadd.f32 %v57, %v172
    %v235 = vadd.f32 %v58, %v175
    %v236 = vadd.f32 %v59, %v180
    %v237 = vadd.f32 %v60, %v183
    %v238 = vadd.f32 %v61, %v188
    %v239 = vadd.f32 %v62, %v191
    %v240 = vadd.f32 %v63, %v196
    %v241 = vadd.f32 %v64, %v199
    %v242 = vadd.f32 %v65, %v204
    %v243 = vadd.f32 %v66, %v207
    %v244 = vadd.f32 %v67, %v212
    %v245 = vadd.f32 %v68, %v215
    %v246 = vadd.f32 %v69, %v220
    %v247 = vadd.f32 %v70, %v223
    %v248 = vadd.f32 %v71, %v228
    %v249 = vadd.f32 %v72, %v231
    %250 = vst [vmem:[#allocation2] sm:$0xff] %v234
    %251 = vst [vmem:[#allocation2 + $0x8] sm:$0xff] %v235
    %252 = vst [vmem:[#allocation2 + $0x10] sm:$0xff] %v236
    %253 = vst [vmem:[#allocation2 + $0x18] sm:$0xff] %v237
    %254 = vst [vmem:[#allocation2 + $0x20] sm:$0xff] %v238
    %255 = vst [vmem:[#allocation2 + $0x28] sm:$0xff] %v239
    %256 = vst [vmem:[#allocation2 + $0x30] sm:$0xff] %v240
    %257 = vst [vmem:[#allocation2 + $0x38] sm:$0xff] %v241
    %258 = vst [vmem:[#allocation2 + $0x40] sm:$0xff] %v242
    %259 = vst [vmem:[#allocation2 + $0x48] sm:$0xff] %v243
    %260 = vst [vmem:[#allocation2 + $0x50] sm:$0xff] %v244
    %261 = vst [vmem:[#allocation2 + $0x58] sm:$0xff] %v245
    %262 = vst [vmem:[#allocation2 + $0x60] sm:$0xff] %v246
    %263 = vst [vmem:[#allocation2 + $0x68] sm:$0xff] %v247
    %264 = vst [vmem:[#allocation2 + $0x70] sm:$0xff] %v248
    %265 = vst [vmem:[#allocation2 + $0x78] sm:$0xff] %v249
    // Predicated region
    $region30: #{tpu_custom_call.1} parent=1 // pred_check
      %p266 = pneg %p25
    $region31: #{tpu_custom_call.1} parent=1 // pred_check_branch
      %268 = sbr.rel (%p266) target = $region33
    $region32: #{tpu_custom_call.1} parent=1 // pred_region
      %v269 = vld [vmem:[#allocation2] sm:$0xff]
      %v270 = vld [vmem:[#allocation2 + $0x8] sm:$0xff]
      %v271 = vld [vmem:[#allocation2 + $0x10] sm:$0xff]
      %v272 = vld [vmem:[#allocation2 + $0x18] sm:$0xff]
      %v273 = vld [vmem:[#allocation2 + $0x20] sm:$0xff]
      %v274 = vld [vmem:[#allocation2 + $0x28] sm:$0xff]
      %v275 = vld [vmem:[#allocation2 + $0x30] sm:$0xff]
      %v276 = vld [vmem:[#allocation2 + $0x38] sm:$0xff]
      %v277 = vld [vmem:[#allocation2 + $0x40] sm:$0xff]
      %v278 = vld [vmem:[#allocation2 + $0x48] sm:$0xff]
      %v279 = vld [vmem:[#allocation2 + $0x50] sm:$0xff]
      %v280 = vld [vmem:[#allocation2 + $0x58] sm:$0xff]
      %v281 = vld [vmem:[#allocation2 + $0x60] sm:$0xff]
      %v282 = vld [vmem:[#allocation2 + $0x68] sm:$0xff]
      %v283 = vld [vmem:[#allocation2 + $0x70] sm:$0xff]
      %v284 = vld [vmem:[#allocation2 + $0x78] sm:$0xff]
      %v285 = vpack.c.bf16 %v270, %v269
      %v286 = vpack.c.bf16 %v272, %v271
      %v287 = vpack.c.bf16 %v274, %v273
      %v288 = vpack.c.bf16 %v276, %v275
      %v289 = vpack.c.bf16 %v278, %v277
      %v290 = vpack.c.bf16 %v280, %v279
      %v291 = vpack.c.bf16 %v282, %v281
      %v292 = vpack.c.bf16 %v284, %v283
      %v293 = vld [vmem:[%s4] sm:$0xf]
      %v294 = vld [vmem:[%s4 + $0x4] sm:$0xf]
      %v295 = vld [vmem:[%s4 + $0x8] sm:$0xf]
      %v296 = vld [vmem:[%s4 + $0xc] sm:$0xf]
      %v297 = vld [vmem:[%s4 + $0x10] sm:$0xf]
      %v298 = vld [vmem:[%s4 + $0x14] sm:$0xf]
      %v299 = vld [vmem:[%s4 + $0x18] sm:$0xf]
      %v300 = vld [vmem:[%s4 + $0x1c] sm:$0xf]
      %v301 = vld [vmem:[%s4 + $0x20] sm:$0xf]
      %v302 = vld [vmem:[%s4 + $0x24] sm:$0xf]
      %v303 = vld [vmem:[%s4 + $0x28] sm:$0xf]
      %v304 = vld [vmem:[%s4 + $0x2c] sm:$0xf]
      %v305 = vld [vmem:[%s4 + $0x30] sm:$0xf]
      %v306 = vld [vmem:[%s4 + $0x34] sm:$0xf]
      %v307 = vld [vmem:[%s4 + $0x38] sm:$0xf]
      %v308 = vld [vmem:[%s4 + $0x3c] sm:$0xf]
      %v325 = vunpack.c.l.b16 %v293
      %v326 = vunpack.c.l.b16 %v294
      %v327 = vunpack.c.l.b16 %v295
      %v328 = vunpack.c.l.b16 %v296
      %v329 = vunpack.c.l.b16 %v297
      %v330 = vunpack.c.l.b16 %v298
      %v331 = vunpack.c.l.b16 %v299
      %v332 = vunpack.c.l.b16 %v300
      %v333 = vunpack.c.l.b16 %v301
      %v334 = vunpack.c.l.b16 %v302
      %v335 = vunpack.c.l.b16 %v303
      %v336 = vunpack.c.l.b16 %v304
      %v337 = vunpack.c.l.b16 %v305
      %v338 = vunpack.c.l.b16 %v306
      %v339 = vunpack.c.l.b16 %v307
      %v340 = vunpack.c.l.b16 %v308
      %v341 = vpack.c.b16 %v326, %v325
      %v342 = vpack.c.b16 %v328, %v327
      %v343 = vpack.c.b16 %v330, %v329
      %v344 = vpack.c.b16 %v332, %v331
      %v345 = vpack.c.b16 %v334, %v333
      %v346 = vpack.c.b16 %v336, %v335
      %v347 = vpack.c.b16 %v338, %v337
      %v348 = vpack.c.b16 %v340, %v339
      %357 = vmatprep.subr.bf16.mxu0 0
      %358 = vmatpush1.bf16.msra.mxu0 %v348
      %359 = vmatprep.subr.bf16.mxu0 0
      %360 = vmatpush1.bf16.msra.mxu0 %v347
      %361 = vmatprep.subr.bf16.mxu0 0
      %362 = vmatpush1.bf16.msra.mxu0 %v346
      %363 = vmatprep.subr.bf16.mxu0 0
      %364 = vmatpush1.bf16.msra.mxu0 %v345
      %365 = vmatprep.subr.bf16.mxu0 0
      %366 = vmatpush1.bf16.msra.mxu0 %v344
      %367 = vmatprep.subr.bf16.mxu0 0
      %368 = vmatpush1.bf16.msra.mxu0 %v343
      %369 = vmatprep.subr.bf16.mxu0 0
      %370 = vmatpush1.bf16.msra.mxu0 %v342
      %371 = vmatprep.subr.bf16.mxu0 0
      %372 = vmatpush1.bf16.msra.mxu0 %v341
      %373 = vmatprep.subr.bf16.mxu0 0
      %374 = vmatpush2.bf16.msra.mxu0 0
      %375 = vmatprep.subr.bf16.mxu0 0
      %376 = vmatpush2.bf16.msra.mxu0 0
      %377 = vmatprep.subr.bf16.mxu0 0
      %378 = vmatpush2.bf16.msra.mxu0 0
      %379 = vmatprep.subr.bf16.mxu0 0
      %380 = vmatpush2.bf16.msra.mxu0 0
      %381 = vmatprep.subr.bf16.mxu0 0
      %382 = vmatpush2.bf16.msra.mxu0 0
      %383 = vmatprep.subr.bf16.mxu0 0
      %384 = vmatpush2.bf16.msra.mxu0 0
      %385 = vmatprep.subr.bf16.mxu0 0
      %386 = vmatpush2.bf16.msra.mxu0 0
      %387 = vmatprep.subr.bf16.mxu0 0
      %388 = vmatpush2.bf16.msra.mxu0 0
      %389 = vmatprep.mubr.bf16.mxu0 0
      %390 = vmatmul.mubr.bf16.gmra.mxu0 %v285
      %v391 = vpop.f32.mrf.mxu0
      %v392 = vadd.f32 0.0, %v391
      %v393 = vpop.f32.mrf.mxu0
      %v394 = vpop.f32.mrf.mxu0
      %v395 = vadd.f32 0.0, %v394
      %v396 = vpop.f32.mrf.mxu0
      %397 = vmatprep.mubr.bf16.mxu0 0
      %398 = vmatmul.mubr.bf16.gmra.mxu0 %v286
      %v399 = vpop.f32.mrf.mxu0
      %v400 = vadd.f32 0.0, %v399
      %v401 = vpop.f32.mrf.mxu0
      %v402 = vpop.f32.mrf.mxu0
      %v403 = vadd.f32 0.0, %v402
      %v404 = vpop.f32.mrf.mxu0
      %405 = vmatprep.mubr.bf16.mxu0 0
      %406 = vmatmul.mubr.bf16.gmra.mxu0 %v287
      %v407 = vpop.f32.mrf.mxu0
      %v408 = vadd.f32 0.0, %v407
      %v409 = vpop.f32.mrf.mxu0
      %v410 = vpop.f32.mrf.mxu0
      %v411 = vadd.f32 0.0, %v410
      %v412 = vpop.f32.mrf.mxu0
      %413 = vmatprep.mubr.bf16.mxu0 0
      %414 = vmatmul.mubr.bf16.gmra.mxu0 %v288
      %v415 = vpop.f32.mrf.mxu0
      %v416 = vadd.f32 0.0, %v415
      %v417 = vpop.f32.mrf.mxu0
      %v418 = vpop.f32.mrf.mxu0
      %v419 = vadd.f32 0.0, %v418
      %v420 = vpop.f32.mrf.mxu0
      %421 = vmatprep.mubr.bf16.mxu0 0
      %422 = vmatmul.mubr.bf16.gmra.mxu0 %v289
      %v423 = vpop.f32.mrf.mxu0
      %v424 = vadd.f32 0.0, %v423
      %v425 = vpop.f32.mrf.mxu0
      %v426 = vpop.f32.mrf.mxu0
      %v427 = vadd.f32 0.0, %v426
      %v428 = vpop.f32.mrf.mxu0
      %429 = vmatprep.mubr.bf16.mxu0 0
      %430 = vmatmul.mubr.bf16.gmra.mxu0 %v290
      %v431 = vpop.f32.mrf.mxu0
      %v432 = vadd.f32 0.0, %v431
      %v433 = vpop.f32.mrf.mxu0
      %v434 = vpop.f32.mrf.mxu0
      %v435 = vadd.f32 0.0, %v434
      %v436 = vpop.f32.mrf.mxu0
      %437 = vmatprep.mubr.bf16.mxu0 0
      %438 = vmatmul.mubr.bf16.gmra.mxu0 %v291
      %v439 = vpop.f32.mrf.mxu0
      %v440 = vadd.f32 0.0, %v439
      %v441 = vpop.f32.mrf.mxu0
      %v442 = vpop.f32.mrf.mxu0
      %v443 = vadd.f32 0.0, %v442
      %v444 = vpop.f32.mrf.mxu0
      %445 = vmatprep.mubr.bf16.mxu0 0
      %446 = vmatmul.mubr.bf16.gmra.mxu0 %v292
      %v447 = vpop.f32.mrf.mxu0
      %v448 = vadd.f32 0.0, %v447
      %v449 = vpop.f32.mrf.mxu0
      %v450 = vpop.f32.mrf.mxu0
      %v451 = vadd.f32 0.0, %v450
      %v452 = vpop.f32.mrf.mxu0
      %453 = vdwg.mxu0
      %v454 = vld [vmem:[%s2] sm:$0xff]
      %v455 = vld [vmem:[%s2 + $0x8] sm:$0xff]
      %v456 = vld [vmem:[%s2 + $0x10] sm:$0xff]
      %v457 = vld [vmem:[%s2 + $0x18] sm:$0xff]
      %v458 = vld [vmem:[%s2 + $0x20] sm:$0xff]
      %v459 = vld [vmem:[%s2 + $0x28] sm:$0xff]
      %v460 = vld [vmem:[%s2 + $0x30] sm:$0xff]
      %v461 = vld [vmem:[%s2 + $0x38] sm:$0xff]
      %v462 = vld [vmem:[%s2 + $0x40] sm:$0xff]
      %v463 = vld [vmem:[%s2 + $0x48] sm:$0xff]
      %v464 = vld [vmem:[%s2 + $0x50] sm:$0xff]
      %v465 = vld [vmem:[%s2 + $0x58] sm:$0xff]
      %v466 = vld [vmem:[%s2 + $0x60] sm:$0xff]
      %v467 = vld [vmem:[%s2 + $0x68] sm:$0xff]
      %v468 = vld [vmem:[%s2 + $0x70] sm:$0xff]
      %v469 = vld [vmem:[%s2 + $0x78] sm:$0xff]
      %471 = vset.pattern.permute.xlu0 0
      %472 = vperm.xlu0 %471, %v454
      %v473 = vpop.permute.xlu0 %472
      %476 = vset.pattern.permute.xlu0 0
      %477 = vperm.xlu0 %476, %v455
      %v478 = vpop.permute.xlu0 %477
      %481 = vset.pattern.permute.xlu0 0
      %482 = vperm.xlu0 %481, %v456
      %v483 = vpop.permute.xlu0 %482
      %486 = vset.pattern.permute.xlu0 0
      %487 = vperm.xlu0 %486, %v457
      %v488 = vpop.permute.xlu0 %487
      %491 = vset.pattern.permute.xlu0 0
      %492 = vperm.xlu0 %491, %v458
      %v493 = vpop.permute.xlu0 %492
      %496 = vset.pattern.permute.xlu0 0
      %497 = vperm.xlu0 %496, %v459
      %v498 = vpop.permute.xlu0 %497
      %501 = vset.pattern.permute.xlu0 0
      %502 = vperm.xlu0 %501, %v460
      %v503 = vpop.permute.xlu0 %502
      %506 = vset.pattern.permute.xlu0 0
      %507 = vperm.xlu0 %506, %v461
      %v508 = vpop.permute.xlu0 %507
      %511 = vset.pattern.permute.xlu0 0
      %512 = vperm.xlu0 %511, %v462
      %v513 = vpop.permute.xlu0 %512
      %516 = vset.pattern.permute.xlu0 0
      %517 = vperm.xlu0 %516, %v463
      %v518 = vpop.permute.xlu0 %517
      %521 = vset.pattern.permute.xlu0 0
      %522 = vperm.xlu0 %521, %v464
      %v523 = vpop.permute.xlu0 %522
      %526 = vset.pattern.permute.xlu0 0
      %527 = vperm.xlu0 %526, %v465
      %v528 = vpop.permute.xlu0 %527
      %531 = vset.pattern.permute.xlu0 0
      %532 = vperm.xlu0 %531, %v466
      %v533 = vpop.permute.xlu0 %532
      %536 = vset.pattern.permute.xlu0 0
      %537 = vperm.xlu0 %536, %v467
      %v538 = vpop.permute.xlu0 %537
      %541 = vset.pattern.permute.xlu0 0
      %542 = vperm.xlu0 %541, %v468
      %v543 = vpop.permute.xlu0 %542
      %546 = vset.pattern.permute.xlu0 0
      %547 = vperm.xlu0 %546, %v469
      %v548 = vpop.permute.xlu0 %547
      %v550 = vmul.f32 %v392, %v473
      %v551 = vmul.f32 %v395, %v478
      %v552 = vmul.f32 %v400, %v483
      %v553 = vmul.f32 %v403, %v488
      %v554 = vmul.f32 %v408, %v493
      %v555 = vmul.f32 %v411, %v498
      %v556 = vmul.f32 %v416, %v503
      %v557 = vmul.f32 %v419, %v508
      %v558 = vmul.f32 %v424, %v513
      %v559 = vmul.f32 %v427, %v518
      %v560 = vmul.f32 %v432, %v523
      %v561 = vmul.f32 %v435, %v528
      %v562 = vmul.f32 %v440, %v533
      %v563 = vmul.f32 %v443, %v538
      %v564 = vmul.f32 %v448, %v543
      %v565 = vmul.f32 %v451, %v548
      %v566 = vld [vmem:[%s5] sm:$0x1]
      %v568 = vlaneseq
      %v569 = vshrl.u32 %v568, 7
      %v570 = vsub.s32 0, %v569
      %v571 = vrot.slane %v566, %v570
      %v573 = vadd.f32 %v550, %v571
      %v574 = vadd.f32 %v551, %v571
      %v575 = vadd.f32 %v552, %v571
      %v576 = vadd.f32 %v553, %v571
      %v577 = vadd.f32 %v554, %v571
      %v578 = vadd.f32 %v555, %v571
      %v579 = vadd.f32 %v556, %v571
      %v580 = vadd.f32 %v557, %v571
      %v581 = vadd.f32 %v558, %v571
      %v582 = vadd.f32 %v559, %v571
      %v583 = vadd.f32 %v560, %v571
      %v584 = vadd.f32 %v561, %v571
      %v585 = vadd.f32 %v562, %v571
      %v586 = vadd.f32 %v563, %v571
      %v587 = vadd.f32 %v564, %v571
      %v588 = vadd.f32 %v565, %v571
      %v589 = vmax.f32 %v573, 0.0
      %v590 = vmax.f32 %v574, 0.0
      %v591 = vmax.f32 %v575, 0.0
      %v592 = vmax.f32 %v576, 0.0
      %v593 = vmax.f32 %v577, 0.0
      %v594 = vmax.f32 %v578, 0.0
      %v595 = vmax.f32 %v579, 0.0
      %v596 = vmax.f32 %v580, 0.0
      %v597 = vmax.f32 %v581, 0.0
      %v598 = vmax.f32 %v582, 0.0
      %v599 = vmax.f32 %v583, 0.0
      %v600 = vmax.f32 %v584, 0.0
      %v601 = vmax.f32 %v585, 0.0
      %v602 = vmax.f32 %v586, 0.0
      %v603 = vmax.f32 %v587, 0.0
      %v604 = vmax.f32 %v588, 0.0
      %v605 = vld [vmem:[%s3] sm:$0xff]
      %v606 = vld [vmem:[%s3 + $0x8] sm:$0xff]
      %v607 = vld [vmem:[%s3 + $0x10] sm:$0xff]
      %v608 = vld [vmem:[%s3 + $0x18] sm:$0xff]
      %v609 = vld [vmem:[%s3 + $0x20] sm:$0xff]
      %v610 = vld [vmem:[%s3 + $0x28] sm:$0xff]
      %v611 = vld [vmem:[%s3 + $0x30] sm:$0xff]
      %v612 = vld [vmem:[%s3 + $0x38] sm:$0xff]
      %v613 = vld [vmem:[%s3 + $0x40] sm:$0xff]
      %v614 = vld [vmem:[%s3 + $0x48] sm:$0xff]
      %v615 = vld [vmem:[%s3 + $0x50] sm:$0xff]
      %v616 = vld [vmem:[%s3 + $0x58] sm:$0xff]
      %v617 = vld [vmem:[%s3 + $0x60] sm:$0xff]
      %v618 = vld [vmem:[%s3 + $0x68] sm:$0xff]
      %v619 = vld [vmem:[%s3 + $0x70] sm:$0xff]
      %v620 = vld [vmem:[%s3 + $0x78] sm:$0xff]
      %622 = vset.pattern.permute.xlu0 0
      %623 = vperm.xlu0 %622, %v605
      %v624 = vpop.permute.xlu0 %623
      %627 = vset.pattern.permute.xlu0 0
      %628 = vperm.xlu0 %627, %v606
      %v629 = vpop.permute.xlu0 %628
      %632 = vset.pattern.permute.xlu0 0
      %633 = vperm.xlu0 %632, %v607
      %v634 = vpop.permute.xlu0 %633
      %637 = vset.pattern.permute.xlu0 0
      %638 = vperm.xlu0 %637, %v608
      %v639 = vpop.permute.xlu0 %638
      %642 = vset.pattern.permute.xlu0 0
      %643 = vperm.xlu0 %642, %v609
      %v644 = vpop.permute.xlu0 %643
      %647 = vset.pattern.permute.xlu0 0
      %648 = vperm.xlu0 %647, %v610
      %v649 = vpop.permute.xlu0 %648
      %652 = vset.pattern.permute.xlu0 0
      %653 = vperm.xlu0 %652, %v611
      %v654 = vpop.permute.xlu0 %653
      %657 = vset.pattern.permute.xlu0 0
      %658 = vperm.xlu0 %657, %v612
      %v659 = vpop.permute.xlu0 %658
      %662 = vset.pattern.permute.xlu0 0
      %663 = vperm.xlu0 %662, %v613
      %v664 = vpop.permute.xlu0 %663
      %667 = vset.pattern.permute.xlu0 0
      %668 = vperm.xlu0 %667, %v614
      %v669 = vpop.permute.xlu0 %668
      %672 = vset.pattern.permute.xlu0 0
      %673 = vperm.xlu0 %672, %v615
      %v674 = vpop.permute.xlu0 %673
      %677 = vset.pattern.permute.xlu0 0
      %678 = vperm.xlu0 %677, %v616
      %v679 = vpop.permute.xlu0 %678
      %682 = vset.pattern.permute.xlu0 0
      %683 = vperm.xlu0 %682, %v617
      %v684 = vpop.permute.xlu0 %683
      %687 = vset.pattern.permute.xlu0 0
      %688 = vperm.xlu0 %687, %v618
      %v689 = vpop.permute.xlu0 %688
      %692 = vset.pattern.permute.xlu0 0
      %693 = vperm.xlu0 %692, %v619
      %v694 = vpop.permute.xlu0 %693
      %697 = vset.pattern.permute.xlu0 0
      %698 = vperm.xlu0 %697, %v620
      %v699 = vpop.permute.xlu0 %698
      %v701 = vmul.f32 %v589, %v624
      %v702 = vmul.f32 %v590, %v629
      %v703 = vmul.f32 %v591, %v634
      %v704 = vmul.f32 %v592, %v639
      %v705 = vmul.f32 %v593, %v644
      %v706 = vmul.f32 %v594, %v649
      %v707 = vmul.f32 %v595, %v654
      %v708 = vmul.f32 %v596, %v659
      %v709 = vmul.f32 %v597, %v664
      %v710 = vmul.f32 %v598, %v669
      %v711 = vmul.f32 %v599, %v674
      %v712 = vmul.f32 %v600, %v679
      %v713 = vmul.f32 %v601, %v684
      %v714 = vmul.f32 %v602, %v689
      %v715 = vmul.f32 %v603, %v694
      %v716 = vmul.f32 %v604, %v699
      %v717 = vpack.c.bf16 %v702, %v701
      %v718 = vpack.c.bf16 %v704, %v703
      %v719 = vpack.c.bf16 %v706, %v705
      %v720 = vpack.c.bf16 %v708, %v707
      %v721 = vpack.c.bf16 %v710, %v709
      %v722 = vpack.c.bf16 %v712, %v711
      %v723 = vpack.c.bf16 %v714, %v713
      %v724 = vpack.c.bf16 %v716, %v715
      %v733 = vunpack.c.l.b16 %v717
      %v734 = vunpack.c.h.b16 %v717
      %v735 = vunpack.c.l.b16 %v718
      %v736 = vunpack.c.h.b16 %v718
      %v737 = vunpack.c.l.b16 %v719
      %v738 = vunpack.c.h.b16 %v719
      %v739 = vunpack.c.l.b16 %v720
      %v740 = vunpack.c.h.b16 %v720
      %v741 = vunpack.c.l.b16 %v721
      %v742 = vunpack.c.h.b16 %v721
      %v743 = vunpack.c.l.b16 %v722
      %v744 = vunpack.c.h.b16 %v722
      %v745 = vunpack.c.l.b16 %v723
      %v746 = vunpack.c.h.b16 %v723
      %v747 = vunpack.c.l.b16 %v724
      %v748 = vunpack.c.h.b16 %v724
      %v749 = vpack.c.b16 %v733, %v733
      %v750 = vpack.c.b16 %v734, %v734
      %v751 = vpack.c.b16 %v735, %v735
      %v752 = vpack.c.b16 %v736, %v736
      %v753 = vpack.c.b16 %v737, %v737
      %v754 = vpack.c.b16 %v738, %v738
      %v755 = vpack.c.b16 %v739, %v739
      %v756 = vpack.c.b16 %v740, %v740
      %v757 = vpack.c.b16 %v741, %v741
      %v758 = vpack.c.b16 %v742, %v742
      %v759 = vpack.c.b16 %v743, %v743
      %v760 = vpack.c.b16 %v744, %v744
      %v761 = vpack.c.b16 %v745, %v745
      %v762 = vpack.c.b16 %v746, %v746
      %v763 = vpack.c.b16 %v747, %v747
      %v764 = vpack.c.b16 %v748, %v748
      %781 = vst [vmem:[#allocation3] sm:$0xf] %v749
      %782 = vst [vmem:[#allocation3 + $0x4] sm:$0xf] %v750
      %783 = vst [vmem:[#allocation3 + $0x8] sm:$0xf] %v751
      %784 = vst [vmem:[#allocation3 + $0xc] sm:$0xf] %v752
      %785 = vst [vmem:[#allocation3 + $0x10] sm:$0xf] %v753
      %786 = vst [vmem:[#allocation3 + $0x14] sm:$0xf] %v754
      %787 = vst [vmem:[#allocation3 + $0x18] sm:$0xf] %v755
      %788 = vst [vmem:[#allocation3 + $0x1c] sm:$0xf] %v756
      %789 = vst [vmem:[#allocation3 + $0x20] sm:$0xf] %v757
      %790 = vst [vmem:[#allocation3 + $0x24] sm:$0xf] %v758
      %791 = vst [vmem:[#allocation3 + $0x28] sm:$0xf] %v759
      %792 = vst [vmem:[#allocation3 + $0x2c] sm:$0xf] %v760
      %793 = vst [vmem:[#allocation3 + $0x30] sm:$0xf] %v761
      %794 = vst [vmem:[#allocation3 + $0x34] sm:$0xf] %v762
      %795 = vst [vmem:[#allocation3 + $0x38] sm:$0xf] %v763
      %796 = vst [vmem:[#allocation3 + $0x3c] sm:$0xf] %v764
    $region33: #{tpu_custom_call.1} parent=1 // pred_fallthru
      _
    // Predicated region
    $region34: #{tpu_custom_call.1} parent=1 // pred_check
      _
    $region35: #{tpu_custom_call.1} parent=1 // pred_check_branch
      %798 = sbr.rel (0) target = $region37
    $region36: #{tpu_custom_call.1} parent=1 // pred_region
      %s800 = ssub.s32 1024, 1024
      %801 = vsyncadd [#allocation4], %s800
      %s802 = sshll.u32 [#allocation3], 4
      %s803 = int_to_ptr.vmem [resolvable:$true] %s802
      %808 = dma.vmem_to_hbm [thread:$0]  %s803, 1024, %s6, [#allocation4], 64, 64, 4
    $region37: #{tpu_custom_call.1} parent=1 // pred_fallthru
      _
    // Predicated region
    $region38: #{tpu_custom_call.1} parent=1 // pred_check
      _
    $region39: #{tpu_custom_call.1} parent=1 // pred_check_branch
      %810 = sbr.rel (0) target = $region41
    $region40: #{tpu_custom_call.1} parent=1 // pred_region
      %811 = dma.done [#allocation4], 1024
    $region41: #{tpu_custom_call.1} parent=1 // pred_fallthru
      _
    %812 = vsyncpa [#allocation4], 1

</llo_original>
